<compile_context>
chip_gen: v5e
topology: v5e:2x2
jax: 0.10.0
libtpu: 0.0.40
codegen_flags: <defaults>
</compile_context>

<pallas_src>
import functools
import math

import jax
import jax.numpy as jnp
from jax.experimental import pallas as pl
from jax.experimental.pallas import tpu as pltpu

input_size = 18
hidden_size = 150
num_classes = 3


def fcn_kernel(x_ref, w_ref, b_ref, o_ref):
    # Linear: [tile, in] @ [in, hidden] + [1, hidden]  (MXU, f32 accumulate)
    y = jnp.dot(x_ref[...], w_ref[...],
                preferred_element_type=jnp.float32,
                precision=jax.lax.Precision.HIGHEST)
    y = y + b_ref[...]
    # ReLU (VPU)
    y = jnp.maximum(y, 0.0)
    # Numerically stable softmax over the feature axis (dim=1).
    m = jnp.max(y, axis=1, keepdims=True)           # XLU cross-lane reduce
    e = jnp.exp(y - m)                              # EUP
    denom = jnp.sum(e, axis=1, keepdims=True)       # XLU cross-lane reduce
    # EUP approximate reciprocal + one Newton step on the [tile,1] column
    # (denom >= 1 because the max term contributes exp(0)=1).
    r = pl.reciprocal(denom, approx=True)
    r = r * (2.0 - denom * r)
    o_ref[...] = (e * r).astype(o_ref.dtype)


def _choose_tile(B, tb):
    """Batch tile: multiple of 8, <= tb, and small enough that large batches
    still produce >= ~8 grid steps (megacore sharding / pipelining)."""
    tile = min(tb, 2048)
    per_step = pl.cdiv(B, 8)                 # aim for at least 8 steps
    per_step = pl.cdiv(per_step, 8) * 8      # sublane-align to 8
    return max(8, min(tile, per_step))


@functools.partial(jax.jit, static_argnames=("tb", "force_pallas"))
def fcn_forward(x, w1_t, b1, *, tb=2048, force_pallas=False):
    """x: [B, input_size]; w1_t: [input_size, hidden_size] (pre-transposed);
    b1: [hidden_size]."""
    B = x.shape[0]

    # Small-batch fallback: fixed pallas_call launch cost dominates below ~1k
    # rows; the fused XLA expression is already at the latency floor there.
    if not force_pallas and B < 1024:
        y = jnp.dot(x, w1_t, precision=jax.lax.Precision.HIGHEST) + b1
        return jax.nn.softmax(jnp.maximum(y, 0.0), axis=1)

    tile = _choose_tile(B, tb)
    grid = pl.cdiv(B, tile)          # ragged final block handled by Pallas
    b1_2d = b1.reshape(1, hidden_size)

    return pl.pallas_call(
        fcn_kernel,
        out_shape=jax.ShapeDtypeStruct((B, hidden_size), jnp.float32),
        grid_spec=pltpu.PrefetchScalarGridSpec(
            num_scalar_prefetch=0,
            grid=(grid,),
            in_specs=[
                # x: streamed per batch tile.
                pl.BlockSpec((tile, input_size), lambda i: (i, 0)),
                # W1 / b1: whole-array blocks, VMEM-resident across all steps.
                pl.BlockSpec((input_size, hidden_size), lambda i: (0, 0)),
                pl.BlockSpec((1, hidden_size), lambda i: (0, 0)),
            ],
            out_specs=pl.BlockSpec((tile, hidden_size), lambda i: (i, 0)),
        ),
        compiler_params=pltpu.CompilerParams(
            dimension_semantics=("parallel",)),
    )(x, w1_t, b1_2d)


def init_params(key):
    # Mimic PyTorch nn.Linear default init: U(-1/sqrt(fan_in), 1/sqrt(fan_in))
    k1, k2, k3, k4 = jax.random.split(key, 4)
    bound1 = 1.0 / math.sqrt(input_size)
    w1 = jax.random.uniform(k1, (hidden_size, input_size), jnp.float32,
                            -bound1, bound1)
    b1 = jax.random.uniform(k2, (hidden_size,), jnp.float32, -bound1, bound1)
    # layer2 params (unused in forward, created only for parity with __init__)
    bound2 = 1.0 / math.sqrt(hidden_size)
    w2 = jax.random.uniform(k3, (num_classes, hidden_size), jnp.float32,
                            -bound2, bound2)
    b2 = jax.random.uniform(k4, (num_classes,), jnp.float32, -bound2, bound2)
    return w1, b1, w2, b2


def _reference(x, w1, b1):
    y = jnp.dot(x, w1.T, precision=jax.lax.Precision.HIGHEST) + b1
    return jax.nn.softmax(jnp.maximum(y, 0.0), axis=1)


if __name__ == "__main__":
    key = jax.random.PRNGKey(0)
    kx, kp = jax.random.split(key)
    w1, b1, w2, b2 = init_params(kp)

    # Pre-transpose W1 once (kernel computes x @ W1.T as x @ w1_t on the MXU).
    w1_t = jax.block_until_ready(jnp.asarray(w1.T))

    # 1) Small-shape run through the Pallas kernel path (force_pallas=True so
    #    the kernel itself is exercised despite the small-batch dispatcher).
    B = 2
    x = jax.random.normal(kx, (B, input_size), jnp.float32)
    out = jax.block_until_ready(fcn_forward(x, w1_t, b1, force_pallas=True))
    ref = _reference(x, w1, b1)
    assert out.shape == (B, hidden_size)
    assert jnp.allclose(out, ref, atol=1e-5, rtol=1e-4)
    assert jnp.allclose(jnp.sum(out, axis=1), jnp.ones((B,)), atol=1e-4)

    # 2) Non-tile-aligned batch: exercises the ragged final block (OOB reads
    #    padded, OOB writes masked) — no jnp.pad / out[:B] anywhere.
    B2 = 37
    x2 = jax.random.normal(jax.random.PRNGKey(1), (B2, input_size), jnp.float32)
    out2 = jax.block_until_ready(fcn_forward(x2, w1_t, b1, force_pallas=True))
    ref2 = _reference(x2, w1, b1)
    assert out2.shape == (B2, hidden_size)
    assert jnp.allclose(out2, ref2, atol=1e-5, rtol=1e-4)
    assert jnp.allclose(jnp.sum(out2, axis=1), jnp.ones((B2,)), atol=1e-4)

    # 3) Dispatcher sanity (small-batch fused-XLA fallback path).
    out3 = jax.block_until_ready(fcn_forward(x, w1_t, b1))
    assert jnp.allclose(out3, ref, atol=1e-5, rtol=1e-4)

    print("KERNEL_OK")
</pallas_src>

<mosaic_0001>
module attributes {stable_mosaic.version = 11 : i64} {
  func.func @fcn_kernel(%arg0: i32, %arg1: memref<8x18xf32, #tpu.memory_space<vmem>>, %arg2: memref<18x150xf32, #tpu.memory_space<vmem>>, %arg3: memref<1x150xf32, #tpu.memory_space<vmem>>, %arg4: memref<8x150xf32, #tpu.memory_space<vmem>>) attributes {dimension_semantics = [#tpu.dimension_semantics<parallel>], iteration_bounds = array<i64: 1>, scalar_prefetch = 0 : i64, scratch_operands = 0 : i64, tpu.core_type = #tpu.core_type<tc>, window_params = [{transform_indices = @transform_0, window_bounds = array<i64: 8, 18>}, {pipeline_mode = #tpu.pipeline_mode<synchronous>, transform_indices = @transform_1, window_bounds = array<i64: 18, 150>}, {pipeline_mode = #tpu.pipeline_mode<synchronous>, transform_indices = @transform_2, window_bounds = array<i64: 1, 150>}, {transform_indices = @transform_3, window_bounds = array<i64: 8, 150>}]} {
    %c0 = arith.constant 0 : index
    %c0_0 = arith.constant 0 : index
    %0 = vector.load %arg1[%c0, %c0_0] : memref<8x18xf32, #tpu.memory_space<vmem>>, vector<8x18xf32>
    %c0_1 = arith.constant 0 : index
    %c0_2 = arith.constant 0 : index
    %1 = vector.load %arg2[%c0_1, %c0_2] : memref<18x150xf32, #tpu.memory_space<vmem>>, vector<18x150xf32>
    %cst = arith.constant dense<0.000000e+00> : vector<8x150xf32>
    %2 = tpu.matmul %0, %1, %cst {dimension_numbers = #tpu.dot_dimension_numbers<[1], [0], [0], [1], [0, 0, 1, 1], [], []>, precision = #tpu.contract_precision<fp32>} : vector<8x18xf32>, vector<18x150xf32>, vector<8x150xf32> -> vector<8x150xf32>
    %c0_3 = arith.constant 0 : index
    %c0_4 = arith.constant 0 : index
    %3 = vector.load %arg3[%c0_3, %c0_4] : memref<1x150xf32, #tpu.memory_space<vmem>>, vector<1x150xf32>
    %4 = vector.broadcast %3 : vector<1x150xf32> to vector<8x150xf32>
    %5 = arith.addf %2, %4 : vector<8x150xf32>
    %cst_5 = arith.constant 0.000000e+00 : f32
    %6 = vector.broadcast %cst_5 : f32 to vector<8x150xf32>
    %7 = arith.maximumf %5, %6 : vector<8x150xf32>
    %cst_6 = arith.constant dense<0xFF800000> : vector<8xf32>
    %8 = vector.multi_reduction <maximumf>, %7, %cst_6 [1] : vector<8x150xf32> to vector<8xf32>
    %9 = vector.shape_cast %8 : vector<8xf32> to vector<8x1xf32>
    %10 = vector.broadcast %9 : vector<8x1xf32> to vector<8x150xf32>
    %11 = arith.subf %7, %10 : vector<8x150xf32>
    %12 = math.exp %11 : vector<8x150xf32>
    %cst_7 = arith.constant dense<0.000000e+00> : vector<8xf32>
    %13 = vector.multi_reduction <add>, %12, %cst_7 [1] : vector<8x150xf32> to vector<8xf32>
    %14 = vector.shape_cast %13 : vector<8xf32> to vector<8x1xf32>
    %15 = tpu.reciprocal %14 {approx = true} : vector<8x1xf32> -> vector<8x1xf32>
    %16 = arith.mulf %14, %15 : vector<8x1xf32>
    %cst_8 = arith.constant 2.000000e+00 : f32
    %17 = vector.broadcast %cst_8 : f32 to vector<8x1xf32>
    %18 = arith.subf %17, %16 : vector<8x1xf32>
    %19 = arith.mulf %15, %18 : vector<8x1xf32>
    %20 = vector.broadcast %19 : vector<8x1xf32> to vector<8x150xf32>
    %21 = arith.mulf %12, %20 : vector<8x150xf32>
    %c0_9 = arith.constant 0 : index
    %c0_10 = arith.constant 0 : index
    %22 = vector.load %arg4[%c0_9, %c0_10] : memref<8x150xf32, #tpu.memory_space<vmem>>, vector<8x150xf32>
    tpu.vector_store %arg4[%c0_9, %c0_10], %21 {strides = array<i32>} : memref<8x150xf32, #tpu.memory_space<vmem>>, vector<8x150xf32>,
    return
  }
  func.func @transform_0(%arg0: i32) -> (i32, i32) {
    %c0_i32 = arith.constant 0 : i32
    %c0_i32_0 = arith.constant 0 : i32
    return %arg0, %c0_i32 : i32, i32
  }
  func.func @transform_1(%arg0: i32) -> (i32, i32) {
    %c0_i32 = arith.constant 0 : i32
    %c0_i32_0 = arith.constant 0 : i32
    %c0_i32_1 = arith.constant 0 : i32
    return %c0_i32, %c0_i32_0 : i32, i32
  }
  func.func @transform_2(%arg0: i32) -> (i32, i32) {
    %c0_i32 = arith.constant 0 : i32
    %c0_i32_0 = arith.constant 0 : i32
    %c0_i32_1 = arith.constant 0 : i32
    return %c0_i32, %c0_i32_0 : i32, i32
  }
  func.func @transform_3(%arg0: i32) -> (i32, i32) {
    %c0_i32 = arith.constant 0 : i32
    %c0_i32_0 = arith.constant 0 : i32
    return %arg0, %c0_i32 : i32, i32
  }
}

</mosaic_0001>

<llo_original>
// kernel: fcn_forward.1
$region0: #{fcn_forward.1}
  #allocation0 [shape = 'u32[]', space=smem, size = 0x4, offset = 0x4, fixed_abs, tag = 'smem constant byte address 0x4 - core index']
  #allocation1 [shape = 'u32[72,128]{1,0:T(1,128)}', space=vmem, size = 0x9000, scoped, tag = 'internal scratch']
  %s0 = inlined_call_operand.hbm [shape: f32[2,18], index: 0, kind: input, shape index: {}]
  %s1 = inlined_call_operand.hbm [shape: f32[18,150], index: 1, kind: input, shape index: {}]
  %s2 = inlined_call_operand.vmem [shape: f32[1,150], index: 2, kind: input, shape index: {}]
  %s3 = inlined_call_operand.hbm [shape: f32[2,150], index: 3, kind: output, shape index: {}]
  %s4 = sld [smem:[#allocation0]]
  $region30: #{fcn_forward.1} parent=0
    _
  %s6 = ssub.s32 1, %s4
  %s7 = scalar_select 0, %s6, %s4
  $region1: #{fcn_forward.1} parent=0
    #allocation2 [shape = 'u8[4096]{0}', space=vmem, size = 0x1000, scoped, tag = 'input window, operand 0, single buffered']
    #allocation3 [shape = 's32[1]{0}', space=sflag, size = 0x4, scoped, tag = 'scoped memory for fcn_forward.1']
    #allocation4 [shape = 's32[1]{0}', space=sflag, size = 0x4, scoped, tag = 'scoped memory for fcn_forward.1']
    #allocation5 [shape = 'u8[24576]{0}', space=vmem, size = 0x6000, scoped, tag = 'input window, operand 1, single buffered']
    #allocation6 [shape = 's32[1]{0}', space=sflag, size = 0x4, scoped, tag = 'scoped memory for fcn_forward.1']
    #allocation7 [shape = 'u8[8192]{0}', space=vmem, size = 0x2000, scoped, tag = 'output window, operand 0, single buffered']
    %8 = vsyncpa [#allocation3], 0
    %9 = vsyncpa [#allocation6], 0
    %10 = vsyncpa [#allocation4], 0
    // Predicated region
    $region2: #{fcn_forward.1} parent=1 // pred_check
      _
    $region3: #{fcn_forward.1} parent=1 // pred_check_branch
      %12 = sbr.rel (0) target = $region5
    $region4: #{fcn_forward.1} parent=1 // pred_region
      %14 = vsyncadd [#allocation3], 96
      %s15 = sshll.u32 %s0, 4
      %s16 = int_to_ptr.hbm [resolvable:$true] %s15
      %s17 = sshll.u32 [#allocation2], 4
      %s18 = int_to_ptr.vmem [resolvable:$true] %s17
      %23 = dma.hbm_to_vmem [thread:$0]  %s16, 32, %s18, [#allocation3], 32, 32, 2
    $region5: #{fcn_forward.1} parent=1 // pred_fallthru
      _
    // Predicated region
    $region6: #{fcn_forward.1} parent=1 // pred_check
      _
    $region7: #{fcn_forward.1} parent=1 // pred_check_branch
      %25 = sbr.rel (0) target = $region9
    $region8: #{fcn_forward.1} parent=1 // pred_region
      %27 = vsyncadd [#allocation6], 0
      %s28 = sshll.u32 %s1, 4
      %s29 = int_to_ptr.hbm [resolvable:$true] %s28
      %s30 = sshll.u32 [#allocation5], 4
      %s31 = int_to_ptr.vmem [resolvable:$true] %s30
      %36 = dma.hbm_to_vmem [thread:$0]  %s29, 768, %s31, [#allocation6], 256, 256, 16
    $region9: #{fcn_forward.1} parent=1 // pred_fallthru
      _
    // Predicated region
    $region10: #{fcn_forward.1} parent=1 // pred_check
      _
    $region11: #{fcn_forward.1} parent=1 // pred_check_branch
      %38 = sbr.rel (0) target = $region13
    $region12: #{fcn_forward.1} parent=1 // pred_region
      _
    $region13: #{fcn_forward.1} parent=1 // pred_fallthru
      _
    // Predicated region
    $region14: #{fcn_forward.1} parent=1 // pred_check
      _
    $region15: #{fcn_forward.1} parent=1 // pred_check_branch
      %40 = sbr.rel (0) target = $region17
    $region16: #{fcn_forward.1} parent=1 // pred_region
      %42 = dma.done [#allocation3], 128
    $region17: #{fcn_forward.1} parent=1 // pred_fallthru
      _
    // Predicated region
    $region18: #{fcn_forward.1} parent=1 // pred_check
      _
    $region19: #{fcn_forward.1} parent=1 // pred_check_branch
      %44 = sbr.rel (0) target = $region21
    $region20: #{fcn_forward.1} parent=1 // pred_region
      %46 = dma.done [#allocation6], 768
    $region21: #{fcn_forward.1} parent=1 // pred_fallthru
      _
    %v47 = vld [vmem:[#allocation2] sm:$0xff]
    %v48 = vld [vmem:[#allocation5] sm:$0xff]
    %v49 = vld [vmem:[#allocation5 + $0x8] sm:$0xff]
    %v50 = vld [vmem:[#allocation5 + $0x10] sm:$0xff]
    %v51 = vld [vmem:[#allocation5 + $0x18] sm:$0xff]
    %v52 = vld [vmem:[#allocation5 + $0x20] sm:$0x3]
    %v53 = vld [vmem:[#allocation5 + $0x28] sm:$0x3]
    %v54 = vld [vmem:[%s2] sm:$0x3]
    %v56 = vperm.slane %v54, 0
    %v57 = vperm.slane %v54, 1
    %vm60 = vcmask 146432
    %v62 = vsel %vm60, %v47, 0
    %vm64 = vcmask 1041408
    %v66 = vsel %vm64, %v52, 0
    %v69 = vsel %vm64, %v53, 0
    %71 = vmatpush.msra.mxu0 0.0
    %72 = vmatpush.msra.mxu0 0.0
    %73 = vmatpush.msra.mxu0 0.0
    %74 = vmatpush.msra.mxu0 0.0
    %75 = vmatpush.msra.mxu0 0.0
    %76 = vmatpush.msra.mxu0 0.0
    %77 = vmatpush.msra.mxu0 0.0
    %78 = vmatpush.msra.mxu0 0.0
    %79 = vmatpush.msra.mxu0 0.0
    %80 = vmatpush.msra.mxu0 0.0
    %81 = vmatpush.msra.mxu0 0.0
    %82 = vmatpush.msra.mxu0 0.0
    %83 = vmatpush.msra.mxu0 0.0
    %v84 = vand.u32 %v66, 4294901760
    %85 = vmatpush.msra.mxu0 %v84
    %v86 = vand.u32 %v50, 4294901760
    %87 = vmatpush.msra.mxu0 %v86
    %v88 = vand.u32 %v48, 4294901760
    %89 = vmatpush.msra.mxu0 %v88
    %v90 = vand.u32 %v62, 4294901760
    %v91 = vsub.f32 %v62, %v90
    %v92 = vand.u32 %v91, 4294901760
    %v93 = vsub.f32 %v91, %v92
    %v94 = vand.u32 %v93, 4294901760
    %95 = vmatmul.f32.gmra.mxu0 %v94
    %v96 = vpop.f32.mrf.mxu0
    %v97 = vadd.f32 %v56, %v96
    %98 = vdwg.mxu0
    %99 = vmatpush.msra.mxu0 0.0
    %100 = vmatpush.msra.mxu0 0.0
    %101 = vmatpush.msra.mxu0 0.0
    %102 = vmatpush.msra.mxu0 0.0
    %103 = vmatpush.msra.mxu0 0.0
    %104 = vmatpush.msra.mxu0 0.0
    %105 = vmatpush.msra.mxu0 0.0
    %106 = vmatpush.msra.mxu0 0.0
    %107 = vmatpush.msra.mxu0 0.0
    %108 = vmatpush.msra.mxu0 0.0
    %109 = vmatpush.msra.mxu0 0.0
    %110 = vmatpush.msra.mxu0 0.0
    %111 = vmatpush.msra.mxu0 0.0
    %v112 = vand.u32 %v66, 4294901760
    %v113 = vsub.f32 %v66, %v112
    %v114 = vand.u32 %v113, 4294901760
    %v115 = vsub.f32 %v113, %v114
    %v116 = vand.u32 %v115, 4294901760
    %117 = vmatpush.msra.mxu0 %v116
    %v118 = vand.u32 %v50, 4294901760
    %v119 = vsub.f32 %v50, %v118
    %v120 = vand.u32 %v119, 4294901760
    %v121 = vsub.f32 %v119, %v120
    %v122 = vand.u32 %v121, 4294901760
    %123 = vmatpush.msra.mxu0 %v122
    %v124 = vand.u32 %v48, 4294901760
    %v125 = vsub.f32 %v48, %v124
    %v126 = vand.u32 %v125, 4294901760
    %v127 = vsub.f32 %v125, %v126
    %v128 = vand.u32 %v127, 4294901760
    %129 = vmatpush.msra.mxu0 %v128
    %v130 = vand.u32 %v62, 4294901760
    %131 = vmatmul.f32.gmra.mxu0 %v130
    %v132 = vpop.f32.mrf.mxu0
    %v133 = vadd.f32 %v97, %v132
    %134 = vdwg.mxu0
    %135 = vmatpush.msra.mxu0 0.0
    %136 = vmatpush.msra.mxu0 0.0
    %137 = vmatpush.msra.mxu0 0.0
    %138 = vmatpush.msra.mxu0 0.0
    %139 = vmatpush.msra.mxu0 0.0
    %140 = vmatpush.msra.mxu0 0.0
    %141 = vmatpush.msra.mxu0 0.0
    %142 = vmatpush.msra.mxu0 0.0
    %143 = vmatpush.msra.mxu0 0.0
    %144 = vmatpush.msra.mxu0 0.0
    %145 = vmatpush.msra.mxu0 0.0
    %146 = vmatpush.msra.mxu0 0.0
    %147 = vmatpush.msra.mxu0 0.0
    %v148 = vand.u32 %v66, 4294901760
    %v149 = vsub.f32 %v66, %v148
    %150 = vmatpush.msra.mxu0 %v149
    %v151 = vand.u32 %v50, 4294901760
    %v152 = vsub.f32 %v50, %v151
    %153 = vmatpush.msra.mxu0 %v152
    %v154 = vand.u32 %v48, 4294901760
    %v155 = vsub.f32 %v48, %v154
    %156 = vmatpush.msra.mxu0 %v155
    %v157 = vand.u32 %v62, 4294901760
    %v158 = vsub.f32 %v62, %v157
    %159 = vmatmul.f32.gmra.mxu0 %v158
    %v160 = vpop.f32.mrf.mxu0
    %v161 = vadd.f32 %v133, %v160
    %162 = vdwg.mxu0
    %163 = vmatpush.msra.mxu0 0.0
    %164 = vmatpush.msra.mxu0 0.0
    %165 = vmatpush.msra.mxu0 0.0
    %166 = vmatpush.msra.mxu0 0.0
    %167 = vmatpush.msra.mxu0 0.0
    %168 = vmatpush.msra.mxu0 0.0
    %169 = vmatpush.msra.mxu0 0.0
    %170 = vmatpush.msra.mxu0 0.0
    %171 = vmatpush.msra.mxu0 0.0
    %172 = vmatpush.msra.mxu0 0.0
    %173 = vmatpush.msra.mxu0 0.0
    %174 = vmatpush.msra.mxu0 0.0
    %175 = vmatpush.msra.mxu0 0.0
    %v176 = vand.u32 %v66, 4294901760
    %177 = vmatpush.msra.mxu0 %v176
    %v178 = vand.u32 %v50, 4294901760
    %179 = vmatpush.msra.mxu0 %v178
    %v180 = vand.u32 %v48, 4294901760
    %181 = vmatpush.msra.mxu0 %v180
    %v182 = vand.u32 %v62, 4294901760
    %v183 = vsub.f32 %v62, %v182
    %v184 = vand.u32 %v183, 4294901760
    %185 = vmatmul.f32.gmra.mxu0 %v184
    %v186 = vpop.f32.mrf.mxu0
    %v187 = vadd.f32 %v161, %v186
    %188 = vdwg.mxu0
    %189 = vmatpush.msra.mxu0 0.0
    %190 = vmatpush.msra.mxu0 0.0
    %191 = vmatpush.msra.mxu0 0.0
    %192 = vmatpush.msra.mxu0 0.0
    %193 = vmatpush.msra.mxu0 0.0
    %194 = vmatpush.msra.mxu0 0.0
    %195 = vmatpush.msra.mxu0 0.0
    %196 = vmatpush.msra.mxu0 0.0
    %197 = vmatpush.msra.mxu0 0.0
    %198 = vmatpush.msra.mxu0 0.0
    %199 = vmatpush.msra.mxu0 0.0
    %200 = vmatpush.msra.mxu0 0.0
    %201 = vmatpush.msra.mxu0 0.0
    %v202 = vand.u32 %v66, 4294901760
    %v203 = vsub.f32 %v66, %v202
    %v204 = vand.u32 %v203, 4294901760
    %205 = vmatpush.msra.mxu0 %v204
    %v206 = vand.u32 %v50, 4294901760
    %v207 = vsub.f32 %v50, %v206
    %v208 = vand.u32 %v207, 4294901760
    %209 = vmatpush.msra.mxu0 %v208
    %v210 = vand.u32 %v48, 4294901760
    %v211 = vsub.f32 %v48, %v210
    %v212 = vand.u32 %v211, 4294901760
    %213 = vmatpush.msra.mxu0 %v212
    %v214 = vand.u32 %v62, 4294901760
    %215 = vmatmul.f32.gmra.mxu0 %v214
    %v216 = vpop.f32.mrf.mxu0
    %v217 = vadd.f32 %v187, %v216
    %218 = vdwg.mxu0
    %219 = vmatpush.msra.mxu0 0.0
    %220 = vmatpush.msra.mxu0 0.0
    %221 = vmatpush.msra.mxu0 0.0
    %222 = vmatpush.msra.mxu0 0.0
    %223 = vmatpush.msra.mxu0 0.0
    %224 = vmatpush.msra.mxu0 0.0
    %225 = vmatpush.msra.mxu0 0.0
    %226 = vmatpush.msra.mxu0 0.0
    %227 = vmatpush.msra.mxu0 0.0
    %228 = vmatpush.msra.mxu0 0.0
    %229 = vmatpush.msra.mxu0 0.0
    %230 = vmatpush.msra.mxu0 0.0
    %231 = vmatpush.msra.mxu0 0.0
    %v232 = vand.u32 %v66, 4294901760
    %233 = vmatpush.msra.mxu0 %v232
    %v234 = vand.u32 %v50, 4294901760
    %235 = vmatpush.msra.mxu0 %v234
    %v236 = vand.u32 %v48, 4294901760
    %237 = vmatpush.msra.mxu0 %v236
    %v238 = vand.u32 %v62, 4294901760
    %239 = vmatmul.f32.gmra.mxu0 %v238
    %v240 = vpop.f32.mrf.mxu0
    %v241 = vadd.f32 %v217, %v240
    %242 = vdwg.mxu0
    %243 = vmatpush.msra.mxu0 0.0
    %244 = vmatpush.msra.mxu0 0.0
    %245 = vmatpush.msra.mxu0 0.0
    %246 = vmatpush.msra.mxu0 0.0
    %247 = vmatpush.msra.mxu0 0.0
    %248 = vmatpush.msra.mxu0 0.0
    %249 = vmatpush.msra.mxu0 0.0
    %250 = vmatpush.msra.mxu0 0.0
    %251 = vmatpush.msra.mxu0 0.0
    %252 = vmatpush.msra.mxu0 0.0
    %253 = vmatpush.msra.mxu0 0.0
    %254 = vmatpush.msra.mxu0 0.0
    %255 = vmatpush.msra.mxu0 0.0
    %v256 = vand.u32 %v69, 4294901760
    %257 = vmatpush.msra.mxu0 %v256
    %v258 = vand.u32 %v51, 4294901760
    %259 = vmatpush.msra.mxu0 %v258
    %v260 = vand.u32 %v49, 4294901760
    %261 = vmatpush.msra.mxu0 %v260
    %v262 = vand.u32 %v62, 4294901760
    %v263 = vsub.f32 %v62, %v262
    %v264 = vand.u32 %v263, 4294901760
    %v265 = vsub.f32 %v263, %v264
    %v266 = vand.u32 %v265, 4294901760
    %267 = vmatmul.f32.gmra.mxu0 %v266
    %v268 = vpop.f32.mrf.mxu0
    %v269 = vadd.f32 %v57, %v268
    %270 = vdwg.mxu0
    %271 = vmatpush.msra.mxu0 0.0
    %272 = vmatpush.msra.mxu0 0.0
    %273 = vmatpush.msra.mxu0 0.0
    %274 = vmatpush.msra.mxu0 0.0
    %275 = vmatpush.msra.mxu0 0.0
    %276 = vmatpush.msra.mxu0 0.0
    %277 = vmatpush.msra.mxu0 0.0
    %278 = vmatpush.msra.mxu0 0.0
    %279 = vmatpush.msra.mxu0 0.0
    %280 = vmatpush.msra.mxu0 0.0
    %281 = vmatpush.msra.mxu0 0.0
    %282 = vmatpush.msra.mxu0 0.0
    %283 = vmatpush.msra.mxu0 0.0
    %v284 = vand.u32 %v69, 4294901760
    %v285 = vsub.f32 %v69, %v284
    %v286 = vand.u32 %v285, 4294901760
    %v287 = vsub.f32 %v285, %v286
    %v288 = vand.u32 %v287, 4294901760
    %289 = vmatpush.msra.mxu0 %v288
    %v290 = vand.u32 %v51, 4294901760
    %v291 = vsub.f32 %v51, %v290
    %v292 = vand.u32 %v291, 4294901760
    %v293 = vsub.f32 %v291, %v292
    %v294 = vand.u32 %v293, 4294901760
    %295 = vmatpush.msra.mxu0 %v294
    %v296 = vand.u32 %v49, 4294901760
    %v297 = vsub.f32 %v49, %v296
    %v298 = vand.u32 %v297, 4294901760
    %v299 = vsub.f32 %v297, %v298
    %v300 = vand.u32 %v299, 4294901760
    %301 = vmatpush.msra.mxu0 %v300
    %v302 = vand.u32 %v62, 4294901760
    %303 = vmatmul.f32.gmra.mxu0 %v302
    %v304 = vpop.f32.mrf.mxu0
    %v305 = vadd.f32 %v269, %v304
    %306 = vdwg.mxu0
    %307 = vmatpush.msra.mxu0 0.0
    %308 = vmatpush.msra.mxu0 0.0
    %309 = vmatpush.msra.mxu0 0.0
    %310 = vmatpush.msra.mxu0 0.0
    %311 = vmatpush.msra.mxu0 0.0
    %312 = vmatpush.msra.mxu0 0.0
    %313 = vmatpush.msra.mxu0 0.0
    %314 = vmatpush.msra.mxu0 0.0
    %315 = vmatpush.msra.mxu0 0.0
    %316 = vmatpush.msra.mxu0 0.0
    %317 = vmatpush.msra.mxu0 0.0
    %318 = vmatpush.msra.mxu0 0.0
    %319 = vmatpush.msra.mxu0 0.0
    %v320 = vand.u32 %v69, 4294901760
    %v321 = vsub.f32 %v69, %v320
    %322 = vmatpush.msra.mxu0 %v321
    %v323 = vand.u32 %v51, 4294901760
    %v324 = vsub.f32 %v51, %v323
    %325 = vmatpush.msra.mxu0 %v324
    %v326 = vand.u32 %v49, 4294901760
    %v327 = vsub.f32 %v49, %v326
    %328 = vmatpush.msra.mxu0 %v327
    %v329 = vand.u32 %v62, 4294901760
    %v330 = vsub.f32 %v62, %v329
    %331 = vmatmul.f32.gmra.mxu0 %v330
    %v332 = vpop.f32.mrf.mxu0
    %v333 = vadd.f32 %v305, %v332
    %334 = vdwg.mxu0
    %335 = vmatpush.msra.mxu0 0.0
    %336 = vmatpush.msra.mxu0 0.0
    %337 = vmatpush.msra.mxu0 0.0
    %338 = vmatpush.msra.mxu0 0.0
    %339 = vmatpush.msra.mxu0 0.0
    %340 = vmatpush.msra.mxu0 0.0
    %341 = vmatpush.msra.mxu0 0.0
    %342 = vmatpush.msra.mxu0 0.0
    %343 = vmatpush.msra.mxu0 0.0
    %344 = vmatpush.msra.mxu0 0.0
    %345 = vmatpush.msra.mxu0 0.0
    %346 = vmatpush.msra.mxu0 0.0
    %347 = vmatpush.msra.mxu0 0.0
    %v348 = vand.u32 %v69, 4294901760
    %349 = vmatpush.msra.mxu0 %v348
    %v350 = vand.u32 %v51, 4294901760
    %351 = vmatpush.msra.mxu0 %v350
    %v352 = vand.u32 %v49, 4294901760
    %353 = vmatpush.msra.mxu0 %v352
    %v354 = vand.u32 %v62, 4294901760
    %v355 = vsub.f32 %v62, %v354
    %v356 = vand.u32 %v355, 4294901760
    %357 = vmatmul.f32.gmra.mxu0 %v356
    %v358 = vpop.f32.mrf.mxu0
    %v359 = vadd.f32 %v333, %v358
    %360 = vdwg.mxu0
    %361 = vmatpush.msra.mxu0 0.0
    %362 = vmatpush.msra.mxu0 0.0
    %363 = vmatpush.msra.mxu0 0.0
    %364 = vmatpush.msra.mxu0 0.0
    %365 = vmatpush.msra.mxu0 0.0
    %366 = vmatpush.msra.mxu0 0.0
    %367 = vmatpush.msra.mxu0 0.0
    %368 = vmatpush.msra.mxu0 0.0
    %369 = vmatpush.msra.mxu0 0.0
    %370 = vmatpush.msra.mxu0 0.0
    %371 = vmatpush.msra.mxu0 0.0
    %372 = vmatpush.msra.mxu0 0.0
    %373 = vmatpush.msra.mxu0 0.0
    %v374 = vand.u32 %v69, 4294901760
    %v375 = vsub.f32 %v69, %v374
    %v376 = vand.u32 %v375, 4294901760
    %377 = vmatpush.msra.mxu0 %v376
    %v378 = vand.u32 %v51, 4294901760
    %v379 = vsub.f32 %v51, %v378
    %v380 = vand.u32 %v379, 4294901760
    %381 = vmatpush.msra.mxu0 %v380
    %v382 = vand.u32 %v49, 4294901760
    %v383 = vsub.f32 %v49, %v382
    %v384 = vand.u32 %v383, 4294901760
    %385 = vmatpush.msra.mxu0 %v384
    %v386 = vand.u32 %v62, 4294901760
    %387 = vmatmul.f32.gmra.mxu0 %v386
    %v388 = vpop.f32.mrf.mxu0
    %v389 = vadd.f32 %v359, %v388
    %390 = vdwg.mxu0
    %391 = vmatpush.msra.mxu0 0.0
    %392 = vmatpush.msra.mxu0 0.0
    %393 = vmatpush.msra.mxu0 0.0
    %394 = vmatpush.msra.mxu0 0.0
    %395 = vmatpush.msra.mxu0 0.0
    %396 = vmatpush.msra.mxu0 0.0
    %397 = vmatpush.msra.mxu0 0.0
    %398 = vmatpush.msra.mxu0 0.0
    %399 = vmatpush.msra.mxu0 0.0
    %400 = vmatpush.msra.mxu0 0.0
    %401 = vmatpush.msra.mxu0 0.0
    %402 = vmatpush.msra.mxu0 0.0
    %403 = vmatpush.msra.mxu0 0.0
    %v404 = vand.u32 %v69, 4294901760
    %405 = vmatpush.msra.mxu0 %v404
    %v406 = vand.u32 %v51, 4294901760
    %407 = vmatpush.msra.mxu0 %v406
    %v408 = vand.u32 %v49, 4294901760
    %409 = vmatpush.msra.mxu0 %v408
    %v410 = vand.u32 %v62, 4294901760
    %411 = vmatmul.f32.gmra.mxu0 %v410
    %v412 = vpop.f32.mrf.mxu0
    %v413 = vadd.f32 %v389, %v412
    %414 = vdwg.mxu0
    %v415 = vmax.f32 %v241, 0.0
    %v416 = vmax.f32 %v413, 0.0
    %vm417 = vcmask 179200
    %v418 = vsel %vm417, %v416, -inf
    %v419 = vmax.f32 %v415, %v418
    %420 = vmax.xlane.f32.xlu0 %v419
    %v421 = vpop.xlane.xlu0 %420
    %v422 = vsub.f32 %v415, %v421
    %v423 = vsub.f32 %v416, %v421
    %v424 = vmul.f32 %v422, 1.442695
    %v425 = vpow.pop %v424
    %v426 = vmul.f32 %v423, 1.442695
    %v427 = vpow.pop %v426
    %v428 = vsel %vm417, %v427, 0.0
    %v429 = vadd.f32 %v425, %v428
    %430 = vadd.xlane.f32.xlu0 %v429
    %v431 = vpop.xlane.xlu0 %430
    %v432 = vrcp.pop %v431
    %v433 = vmul.f32 %v431, %v432
    %v434 = vsub.f32 2.0, %v433
    %v435 = vmul.f32 %v432, %v434
    %v436 = vmul.f32 %v425, %v435
    %v437 = vmul.f32 %v427, %v435
    %v440 = vrot.slane %v437, 6
    %v441 = vsel %vm64, %v436, %v440
    %vm442 = vcmask 1043458
    %v443 = vsel %vm442, %v436, %v440
    %v444 = vrot.slane %v443, 2
    %vm445 = vcmask 1045508
    %v446 = vsel %vm445, %v436, %v440
    %v447 = vrot.slane %v446, 4
    %vm448 = vcmask 1045504
    %v449 = vsel %vm448, %v440, %v436
    %v450 = vrot.slane %v449, 6
    %vm455 = vcmask 175106
    %vm456 = vmor %vm455, %vm64
    %457 = vst.msk [vmem:[#allocation7] sm:$0xf] %vm456, %v441
    %458 = vst.msk [vmem:[#allocation7 + $0x4] sm:$0xf] %vm456, %v444
    %459 = vst.msk [vmem:[#allocation7 + $0x8] sm:$0xf] %vm456, %v447
    %460 = vst.msk [vmem:[#allocation7 + $0xc] sm:$0xf] %vm456, %v450
    // Predicated region
    $region22: #{fcn_forward.1} parent=1 // pred_check
      _
    $region23: #{fcn_forward.1} parent=1 // pred_check_branch
      %462 = sbr.rel (0) target = $region25
    $region24: #{fcn_forward.1} parent=1 // pred_region
      %464 = vsyncadd [#allocation4], 192
      %s465 = sshll.u32 [#allocation7], 4
      %s466 = int_to_ptr.vmem [resolvable:$true] %s465
      %s467 = sshll.u32 %s3, 4
      %s468 = int_to_ptr.hbm [resolvable:$true] %s467
      %473 = dma.vmem_to_hbm [thread:$0]  %s466, 64, %s468, [#allocation4], 64, 64, 4
    $region25: #{fcn_forward.1} parent=1 // pred_fallthru
      _
    // Predicated region
    $region26: #{fcn_forward.1} parent=1 // pred_check
      _
    $region27: #{fcn_forward.1} parent=1 // pred_check_branch
      %475 = sbr.rel (0) target = $region29
    $region28: #{fcn_forward.1} parent=1 // pred_region
      %477 = dma.done [#allocation4], 256
    $region29: #{fcn_forward.1} parent=1 // pred_fallthru
      _
    %478 = vsyncpa [#allocation3], 1
    %479 = vsyncpa [#allocation6], 1
    %480 = vsyncpa [#allocation4], 1

</llo_original>
